<compile_context>
chip_gen: v7x
topology: tpu7x:2x2x1
jax: 0.10.0
libtpu: 0.0.40
codegen_flags: <defaults>
</compile_context>

<pallas_src>
import jax
import jax.numpy as jnp
from jax.experimental import pallas as pl
from jax.experimental.pallas import tpu as pltpu

BN_EPS = 1e-5


def _round_up(x, m):
    return ((x + m - 1) // m) * m


def _pick_k_tile(E, cap):
    """Largest multiple-of-128 divisor of E that is <= cap; else the full E."""
    for cand in (cap, 512, 256, 128):
        if cand <= cap and cand % 128 == 0 and E % cand == 0:
            return cand
    return E


# ---------------------------------------------------------------------------
# Kernel
# ---------------------------------------------------------------------------
def decision_kernel(x_ref, w1_ref, b1_ref, w2_ref, b2_ref, out_ref, acc_ref):
    """One (batch_tile i, k_tile k) grid step.

    x_ref:  [TM, TK]   bf16 activations
    w1_ref: [TK, E]    bf16 BN-folded first-layer weights (pre-transposed)
    b1_ref: [1,  E]    f32  BN-folded first-layer bias
    w2_ref: [E,  Cpad] bf16 second-layer weights (pre-transposed, class-padded)
    b2_ref: [1,  Cpad] f32  second-layer bias (class-padded)
    out_ref:[TM, Cpad] f32  logits
    acc_ref:[TM, E]    f32  VMEM accumulator, persists across the K axis
    """
    k = pl.program_id(1)

    @pl.when(k == 0)
    def _():
        acc_ref[...] = jnp.zeros_like(acc_ref)

    # fc[0] partial product: bf16 MXU matmul, f32 accumulation.
    acc_ref[...] += jnp.dot(x_ref[...], w1_ref[...],
                            preferred_element_type=jnp.float32)

    @pl.when(k == pl.num_programs(1) - 1)
    def _():
        # fc[0] bias + fc[1] BatchNorm (already folded into w1/b1) + fc[2] ReLU,
        # all in f32 (cast to bf16 only right before the second MXU op).
        h = jnp.maximum(acc_ref[...] + b1_ref[...], 0.0)
        # fc[3] Dropout: identity in eval mode.
        # fc[4] Linear(emb_dim, num_classes).
        logits = jnp.dot(h.astype(w2_ref.dtype), w2_ref[...],
                         preferred_element_type=jnp.float32) + b2_ref[...]
        out_ref[...] = logits.astype(out_ref.dtype)


# ---------------------------------------------------------------------------
# Wrapper
# ---------------------------------------------------------------------------
def decision_module_forward(x, prepped, num_classes, *, tile_m=128, tile_k=512):
    """x: [B, E] float32.  prepped: output of prep_params.  Returns [B, C] f32."""
    w1, b1, w2, b2 = prepped
    B, E = x.shape
    Cpad = w2.shape[1]
    assert w1.shape == (E, E) and w2.shape[0] == E

    # Batch tile: multiple of 16 (bf16 sublane packing), capped at tile_m.
    tm = min(_round_up(tile_m, 16), _round_up(B, 16))
    Bpad = _round_up(B, tm)
    tk = _pick_k_tile(E, tile_k)

    x_bf16 = x.astype(jnp.bfloat16)
    if Bpad != B:
        x_bf16 = jnp.pad(x_bf16, ((0, Bpad - B), (0, 0)))

    nb, nk = Bpad // tm, E // tk

    flops = 2 * Bpad * E * E + 2 * Bpad * E * Cpad
    bytes_accessed = (x_bf16.size * 2 + w1.size * 2 + w2.size * 2
                      + b1.size * 4 + b2.size * 4 + Bpad * Cpad * 4)

    out = pl.pallas_call(
        decision_kernel,
        out_shape=jax.ShapeDtypeStruct((Bpad, Cpad), jnp.float32),
        grid_spec=pltpu.PrefetchScalarGridSpec(
            num_scalar_prefetch=0,
            grid=(nb, nk),
            in_specs=[
                pl.BlockSpec((tm, tk), lambda i, k: (i, k)),    # x tile
                pl.BlockSpec((tk, E), lambda i, k: (k, 0)),     # w1 (BN folded)
                pl.BlockSpec((1, E), lambda i, k: (0, 0)),      # b1 (BN folded)
                pl.BlockSpec((E, Cpad), lambda i, k: (0, 0)),   # w2 (resident)
                pl.BlockSpec((1, Cpad), lambda i, k: (0, 0)),   # b2
            ],
            out_specs=pl.BlockSpec((tm, Cpad), lambda i, k: (i, 0)),
            scratch_shapes=[pltpu.VMEM((tm, E), jnp.float32)],
        ),
        compiler_params=pltpu.CompilerParams(
            dimension_semantics=("parallel", "arbitrary")),
        cost_estimate=pl.CostEstimate(
            flops=flops, transcendentals=0, bytes_accessed=bytes_accessed),
    )(x_bf16, w1, b1, w2, b2)

    return out[:B, :num_classes]


# ---------------------------------------------------------------------------
# Parameter handling
# ---------------------------------------------------------------------------
def fold_batchnorm(w1, b1, gamma, beta, mean, var):
    """Fold eval-mode BatchNorm1d into the preceding Linear (all f32)."""
    scale = gamma * jax.lax.rsqrt(var + BN_EPS)          # [1, E]
    return w1 * scale, (b1 - mean) * scale + beta


def prep_params(raw_params):
    """Fold BN (in f32), cast weights to bf16, pad class dim to 128-multiple."""
    w1, b1, gamma, beta, mean, var, w2, b2 = raw_params
    w1_f, b1_f = fold_batchnorm(w1, b1, gamma, beta, mean, var)
    C = w2.shape[1]
    Cpad = _round_up(C, 128)
    w2_p = jnp.pad(w2, ((0, 0), (0, Cpad - C)))
    b2_p = jnp.pad(b2, ((0, 0), (0, Cpad - C)))
    return (w1_f.astype(jnp.bfloat16), b1_f.astype(jnp.float32),
            w2_p.astype(jnp.bfloat16), b2_p.astype(jnp.float32)), C


def init_params(key, emb_dim, num_classes, dtype=jnp.float32):
    """Deterministic synthetic parameters (shapes match DecisionModule.__init__)."""
    k1, k2, k3, k4, k5, k6, k7, k8 = jax.random.split(key, 8)
    s1 = 1.0 / jnp.sqrt(emb_dim)
    # nn.Linear stores weight as [out, in]; we keep the transposed [in, out].
    w1 = jax.random.uniform(k1, (emb_dim, emb_dim), dtype, -s1, s1)
    b1 = jax.random.uniform(k2, (1, emb_dim), dtype, -s1, s1)
    gamma = jax.random.uniform(k5, (1, emb_dim), dtype, 0.5, 1.5)
    beta = 0.1 * jax.random.normal(k6, (1, emb_dim), dtype)
    running_mean = 0.1 * jax.random.normal(k7, (1, emb_dim), dtype)
    running_var = jax.random.uniform(k8, (1, emb_dim), dtype, 0.5, 1.5)
    w2 = jax.random.uniform(k3, (emb_dim, num_classes), dtype, -s1, s1)
    b2 = jax.random.uniform(k4, (1, num_classes), dtype, -s1, s1)
    return (w1, b1, gamma, beta, running_mean, running_var, w2, b2)


# ---------------------------------------------------------------------------
# References
# ---------------------------------------------------------------------------
def reference_forward(x, raw_params):
    """Pure-JAX f32 eval-mode forward with explicit BatchNorm (spec semantics)."""
    w1, b1, gamma, beta, mean, var, w2, b2 = raw_params
    h = x @ w1 + b1
    h = (h - mean) / jnp.sqrt(var + BN_EPS) * gamma + beta
    h = jnp.maximum(h, 0.0)
    return h @ w2 + b2


def reference_folded(x, prepped, num_classes):
    """Precision-matched reference: same bf16 weights/activations as the kernel."""
    w1, b1, w2, b2 = prepped
    xb = x.astype(jnp.bfloat16).astype(jnp.float32)
    h = xb @ w1.astype(jnp.float32) + b1
    h = jnp.maximum(h, 0.0)
    hb = h.astype(jnp.bfloat16).astype(jnp.float32)
    return (hb @ w2.astype(jnp.float32) + b2)[:, :num_classes]


if __name__ == "__main__":
    # Small shapes consistent with the module (emb_dim=256 matches the default,
    # num_classes=1000 exercises the lane-padding path, B=48 exercises batch
    # tiling).  tile_m=16 / tile_k=128 force a multi-step (3 x 2) grid.
    B, EMB, NUM_CLASSES = 48, 256, 1000

    key = jax.random.PRNGKey(0)
    kx, kp = jax.random.split(key)
    x = jax.random.normal(kx, (B, EMB), jnp.float32)
    raw = init_params(kp, EMB, NUM_CLASSES)

    # 1) Validate the BN fold itself in full f32.
    w1f, b1f = fold_batchnorm(raw[0], raw[1], raw[2], raw[3], raw[4], raw[5])
    ref_bn = reference_forward(x, raw)
    ref_fold_f32 = jnp.maximum(x @ w1f + b1f, 0.0) @ raw[6] + raw[7]
    assert jnp.allclose(ref_fold_f32, ref_bn, atol=1e-3, rtol=1e-3), "BN fold mismatch"

    # 2) Run the Pallas kernel and compare against a precision-matched reference.
    prepped, C = prep_params(raw)
    logits = decision_module_forward(x, prepped, C, tile_m=16, tile_k=128)
    logits = jax.block_until_ready(logits)

    assert logits.shape == (B, NUM_CLASSES)
    ref = reference_folded(x, prepped, C)
    assert jnp.allclose(logits, ref, atol=5e-3, rtol=5e-3), "mismatch vs reference"

    print("KERNEL_OK")
</pallas_src>

<mosaic_0001>
module attributes {stable_mosaic.version = 11 : i64} {
  func.func @decision_kernel(%arg0: i32, %arg1: i32, %arg2: memref<16x128xbf16, #tpu.memory_space<vmem>>, %arg3: memref<128x256xbf16, #tpu.memory_space<vmem>>, %arg4: memref<1x256xf32, #tpu.memory_space<vmem>>, %arg5: memref<256x1024xbf16, #tpu.memory_space<vmem>>, %arg6: memref<1x1024xf32, #tpu.memory_space<vmem>>, %arg7: memref<16x1024xf32, #tpu.memory_space<vmem>>, %arg8: memref<16x256xf32, #tpu.memory_space<vmem>>) attributes {dimension_semantics = [#tpu.dimension_semantics<parallel>, #tpu.dimension_semantics<arbitrary>], iteration_bounds = array<i64: 3, 2>, scalar_prefetch = 0 : i64, scratch_operands = 1 : i64, tpu.core_type = #tpu.core_type<tc>, window_params = [{transform_indices = @transform_0, window_bounds = array<i64: 16, 128>}, {transform_indices = @transform_1, window_bounds = array<i64: 128, 256>}, {pipeline_mode = #tpu.pipeline_mode<synchronous>, transform_indices = @transform_2, window_bounds = array<i64: 1, 256>}, {pipeline_mode = #tpu.pipeline_mode<synchronous>, transform_indices = @transform_3, window_bounds = array<i64: 256, 1024>}, {pipeline_mode = #tpu.pipeline_mode<synchronous>, transform_indices = @transform_4, window_bounds = array<i64: 1, 1024>}, {transform_indices = @transform_5, window_bounds = array<i64: 16, 1024>}]} {
    %c0_i32 = arith.constant 0 : i32
    %0 = arith.cmpi eq, %arg1, %c0_i32 : i32
    %1 = arith.extui %0 : i1 to i32
    %c0_i32_0 = arith.constant 0 : i32
    %2 = arith.cmpi ne, %1, %c0_i32_0 : i32
    scf.if %2 {
      %cst_9 = arith.constant 0.000000e+00 : f32
      %12 = vector.broadcast %cst_9 : f32 to vector<16x256xf32>
      %c0_10 = arith.constant 0 : index
      %c0_11 = arith.constant 0 : index
      %13 = vector.load %arg8[%c0_10, %c0_11] : memref<16x256xf32, #tpu.memory_space<vmem>>, vector<16x256xf32>
      tpu.vector_store %arg8[%c0_10, %c0_11], %12 {strides = array<i32>} : memref<16x256xf32, #tpu.memory_space<vmem>>, vector<16x256xf32>,
    } else {
    }
    %c0 = arith.constant 0 : index
    %c0_1 = arith.constant 0 : index
    %3 = vector.load %arg8[%c0, %c0_1] : memref<16x256xf32, #tpu.memory_space<vmem>>, vector<16x256xf32>
    %c0_2 = arith.constant 0 : index
    %c0_3 = arith.constant 0 : index
    %4 = vector.load %arg2[%c0_2, %c0_3] : memref<16x128xbf16, #tpu.memory_space<vmem>>, vector<16x128xbf16>
    %c0_4 = arith.constant 0 : index
    %c0_5 = arith.constant 0 : index
    %5 = vector.load %arg3[%c0_4, %c0_5] : memref<128x256xbf16, #tpu.memory_space<vmem>>, vector<128x256xbf16>
    %cst = arith.constant dense<0.000000e+00> : vector<16x256xf32>
    %6 = tpu.matmul %4, %5, %cst {dimension_numbers = #tpu.dot_dimension_numbers<[1], [0], [0], [1], [0, 0, 1, 1], [], []>} : vector<16x128xbf16>, vector<128x256xbf16>, vector<16x256xf32> -> vector<16x256xf32>
    %7 = arith.addf %3, %6 : vector<16x256xf32>
    %c0_6 = arith.constant 0 : index
    %c0_7 = arith.constant 0 : index
    %8 = vector.load %arg8[%c0_6, %c0_7] : memref<16x256xf32, #tpu.memory_space<vmem>>, vector<16x256xf32>
    tpu.vector_store %arg8[%c0_6, %c0_7], %7 {strides = array<i32>} : memref<16x256xf32, #tpu.memory_space<vmem>>, vector<16x256xf32>,
    %c1_i32 = arith.constant 1 : i32
    %9 = arith.cmpi eq, %arg1, %c1_i32 : i32
    %10 = arith.extui %9 : i1 to i32
    %c0_i32_8 = arith.constant 0 : i32
    %11 = arith.cmpi ne, %10, %c0_i32_8 : i32
    scf.if %11 {
      %c0_9 = arith.constant 0 : index
      %c0_10 = arith.constant 0 : index
      %12 = vector.load %arg8[%c0_9, %c0_10] : memref<16x256xf32, #tpu.memory_space<vmem>>, vector<16x256xf32>
      %c0_11 = arith.constant 0 : index
      %c0_12 = arith.constant 0 : index
      %13 = vector.load %arg4[%c0_11, %c0_12] : memref<1x256xf32, #tpu.memory_space<vmem>>, vector<1x256xf32>
      %14 = vector.broadcast %13 : vector<1x256xf32> to vector<16x256xf32>
      %15 = arith.addf %12, %14 : vector<16x256xf32>
      %cst_13 = arith.constant 0.000000e+00 : f32
      %16 = vector.broadcast %cst_13 : f32 to vector<16x256xf32>
      %17 = arith.maximumf %15, %16 : vector<16x256xf32>
      %18 = arith.truncf %17 : vector<16x256xf32> to vector<16x256xbf16>
      %c0_14 = arith.constant 0 : index
      %c0_15 = arith.constant 0 : index
      %19 = vector.load %arg5[%c0_14, %c0_15] : memref<256x1024xbf16, #tpu.memory_space<vmem>>, vector<256x1024xbf16>
      %cst_16 = arith.constant dense<0.000000e+00> : vector<16x1024xf32>
      %20 = tpu.matmul %18, %19, %cst_16 {dimension_numbers = #tpu.dot_dimension_numbers<[1], [0], [0], [1], [0, 0, 1, 1], [], []>} : vector<16x256xbf16>, vector<256x1024xbf16>, vector<16x1024xf32> -> vector<16x1024xf32>
      %c0_17 = arith.constant 0 : index
      %c0_18 = arith.constant 0 : index
      %21 = vector.load %arg6[%c0_17, %c0_18] : memref<1x1024xf32, #tpu.memory_space<vmem>>, vector<1x1024xf32>
      %22 = vector.broadcast %21 : vector<1x1024xf32> to vector<16x1024xf32>
      %23 = arith.addf %20, %22 : vector<16x1024xf32>
      %c0_19 = arith.constant 0 : index
      %c0_20 = arith.constant 0 : index
      %24 = vector.load %arg7[%c0_19, %c0_20] : memref<16x1024xf32, #tpu.memory_space<vmem>>, vector<16x1024xf32>
      tpu.vector_store %arg7[%c0_19, %c0_20], %23 {strides = array<i32>} : memref<16x1024xf32, #tpu.memory_space<vmem>>, vector<16x1024xf32>,
    } else {
    }
    return
  }
  func.func @transform_0(%arg0: i32, %arg1: i32) -> (i32, i32) {
    %c0_i32 = arith.constant 0 : i32
    return %arg0, %arg1 : i32, i32
  }
  func.func @transform_1(%arg0: i32, %arg1: i32) -> (i32, i32) {
    %c0_i32 = arith.constant 0 : i32
    %c0_i32_0 = arith.constant 0 : i32
    return %arg1, %c0_i32 : i32, i32
  }
  func.func @transform_2(%arg0: i32, %arg1: i32) -> (i32, i32) {
    %c0_i32 = arith.constant 0 : i32
    %c0_i32_0 = arith.constant 0 : i32
    %c0_i32_1 = arith.constant 0 : i32
    return %c0_i32, %c0_i32_0 : i32, i32
  }
  func.func @transform_3(%arg0: i32, %arg1: i32) -> (i32, i32) {
    %c0_i32 = arith.constant 0 : i32
    %c0_i32_0 = arith.constant 0 : i32
    %c0_i32_1 = arith.constant 0 : i32
    return %c0_i32, %c0_i32_0 : i32, i32
  }
  func.func @transform_4(%arg0: i32, %arg1: i32) -> (i32, i32) {
    %c0_i32 = arith.constant 0 : i32
    %c0_i32_0 = arith.constant 0 : i32
    %c0_i32_1 = arith.constant 0 : i32
    return %c0_i32, %c0_i32_0 : i32, i32
  }
  func.func @transform_5(%arg0: i32, %arg1: i32) -> (i32, i32) {
    %c0_i32 = arith.constant 0 : i32
    %c0_i32_0 = arith.constant 0 : i32
    return %arg0, %c0_i32 : i32, i32
  }
}

</mosaic_0001>

<llo_original>
// kernel: tpu_custom_call.1
$region0: #{tpu_custom_call.1}
  #allocation0 [shape = 'u32[]', space=smem, size = 0x4, offset = 0x4, fixed_abs, tag = 'smem constant byte address 0x4 - core index']
  #allocation1 [shape = 'u32[144,128]{1,0:T(1,128)}', space=vmem, size = 0x12000, scoped, tag = 'internal scratch']
  #allocation2 [shape = 'f32[16,256]{1,0:T(8,128)}', space=vmem, size = 0x4000, scoped, tag = 'scratch operand']
  %s0 = inlined_call_operand.hbm [shape: bf16[48,256], index: 0, kind: input, shape index: {}]
  %s1 = inlined_call_operand.hbm [shape: bf16[256,256], index: 1, kind: input, shape index: {}]
  %s2 = inlined_call_operand.vmem [shape: f32[1,256], index: 2, kind: input, shape index: {}]
  %s3 = inlined_call_operand.hbm [shape: bf16[256,1024], index: 3, kind: input, shape index: {}]
  %s4 = inlined_call_operand.vmem [shape: f32[1,1024], index: 4, kind: input, shape index: {}]
  %s5 = inlined_call_operand.hbm [shape: f32[48,1024], index: 5, kind: output, shape index: {}]
  %s6 = sld [smem:[#allocation0]]
  $region73: #{tpu_custom_call.1} parent=0
    _
  %s8 = ssub.s32 1, %s6
  %s9 = scalar_select 0, %s8, %s6
  $region1: #{tpu_custom_call.1} parent=0
    #allocation3 [shape = 'u8[8192]{0}', space=vmem, size = 0x2000, scoped, tag = 'input window, operand 0']
    #allocation4 [shape = 's32[2]{0}', space=sflag, size = 0x8, scoped, tag = 'scoped memory for tpu_custom_call.1']
    #allocation5 [shape = 's32[2]{0}', space=sflag, size = 0x8, scoped, tag = 'scoped memory for tpu_custom_call.1']
    #allocation6 [shape = 'u8[131072]{0}', space=vmem, size = 0x20000, scoped, tag = 'input window, operand 1']
    #allocation7 [shape = 's32[2]{0}', space=sflag, size = 0x8, scoped, tag = 'scoped memory for tpu_custom_call.1']
    #allocation8 [shape = 'u8[524288]{0}', space=vmem, size = 0x80000, scoped, tag = 'input window, operand 3, single buffered']
    #allocation9 [shape = 'u8[131072]{0}', space=vmem, size = 0x20000, scoped, tag = 'output window, operand 0']
    %10 = vsyncpa [#allocation4], 0
    %s11 = scalar_lea.sflag [#allocation4], 1
    %12 = vsyncpa %s11, 0
    %13 = vsyncpa [#allocation7], 0
    %s14 = scalar_lea.sflag [#allocation7], 1
    %15 = vsyncpa %s14, 0
    %16 = vsyncpa [#allocation5], 0
    %s17 = scalar_lea.sflag [#allocation5], 1
    %18 = vsyncpa %s17, 0
    loop: start=0, step=1, limit=8
    $region2: #{tpu_custom_call.1} parent=1 // loop_pre_header
      _
    $region3: #{tpu_custom_call.1} parent=1 // loop_header
      %s20 = sphi 0, %s24
      %p21 = scmp.ge.s32.totalorder %s20, 8
      %s27 = sphi 0, %s39
      %s28 = sphi 0, %s35
      %s29 = sphi 0, %s27
      %s30 = sphi 0, %s28
      %s31 = sphi 0, %s29
      %s32 = sphi 0, %s30
      %s44 = sphi 0, %s46
      %s47 = sphi 0, %s44
      %s48 = sphi 0, %s47
      %s64 = sphi 0, %s48
      %s70 = sphi 0, %s72
      %s73 = sphi 0, %s70
      %s74 = sphi 0, %s73
      %s90 = sphi 0, %s74
      %s94 = sphi 0, %s94
      %s96 = sphi 0, %s94
      %s97 = sphi 0, %s96
      %s111 = sphi 0, %s97
      %s115 = sphi 0, %s115
      %s117 = sphi 0, %s115
      %s118 = sphi 0, %s117
      %s132 = sphi 0, %s118
      %s136 = sphi 0, %s136
      %s138 = sphi 0, %s136
      %s139 = sphi 0, %s138
      %s153 = sphi 0, %s139
      %s159 = sphi 0, %s161
      %s162 = sphi 0, %s159
      %s163 = sphi 0, %s162
      %s179 = sphi 0, %s163
    $region4: #{tpu_custom_call.1} parent=1 // loop_header_branch
      %23 = sbr.rel (%p21) target = $region8
    $region5: #{tpu_custom_call.1} parent=1 // loop_body
      %s25 = ssub.s32 %s20, 1
      %s26 = ssub.s32 %s20, 2
      %s33 = sadd.s32 1, %s28
      %p34 = scmp.ge.s32.totalorder %s33, 2
      %s35 = scalar_select %p34, 0, %s33
      %s36 = sadd.s32 1, %s27
      %s37 = scalar_select %p34, %s36, %s27
      %p38 = scmp.ge.s32.totalorder %s37, 3
      %s39 = scalar_select %p38, 0, %s37
      %s40 = ssub.s32 %s27, %s39
      %s41 = ssub.s32 %s28, %s35
      %s42 = sor.u32 %s40, %s41
      %p43 = scmp.eq.s32.totalorder %s42, 0
      %s45 = sadd.s32 %s44, 1
      %s46 = scalar_select %p43, %s44, %s45
      %p49 = pneg %p43
      %p50 = scmp.eq.s32.totalorder %s20, 5
      %p51 = por %p49, %p50
      %p52 = scmp.ne.s32.totalorder %s44, %s47
      %p53 = scmp.eq.s32.totalorder %s20, 0
      %p54 = por %p52, %p53
      %p55 = scmp.ne.s32.totalorder %s44, %s47
      %p56 = scmp.eq.s32.totalorder %s25, 5
      %p57 = por %p55, %p56
      %p58 = scmp.ne.s32.totalorder %s47, %s48
      %p59 = scmp.eq.s32.totalorder %s25, 0
      %p60 = por %p58, %p59
      %p61 = scmp.ne.s32.totalorder %s47, %s48
      %p62 = scmp.eq.s32.totalorder %s26, 5
      %p63 = por %p61, %p62
      %p65 = scmp.ne.s32.totalorder %s48, %s64
      %p66 = scmp.eq.s32.totalorder %s26, 0
      %p67 = por %p65, %p66
      %s68 = ssub.s32 %s28, %s35
      %p69 = scmp.eq.s32.totalorder %s68, 0
      %s71 = sadd.s32 %s70, 1
      %s72 = scalar_select %p69, %s70, %s71
      %p75 = pneg %p69
      %p76 = scmp.eq.s32.totalorder %s20, 5
      %p77 = por %p75, %p76
      %p78 = scmp.ne.s32.totalorder %s70, %s73
      %p79 = scmp.eq.s32.totalorder %s20, 0
      %p80 = por %p78, %p79
      %p81 = scmp.ne.s32.totalorder %s70, %s73
      %p82 = scmp.eq.s32.totalorder %s25, 5
      %p83 = por %p81, %p82
      %p84 = scmp.ne.s32.totalorder %s73, %s74
      %p85 = scmp.eq.s32.totalorder %s25, 0
      %p86 = por %p84, %p85
      %p87 = scmp.ne.s32.totalorder %s73, %s74
      %p88 = scmp.eq.s32.totalorder %s26, 5
      %p89 = por %p87, %p88
      %p91 = scmp.ne.s32.totalorder %s74, %s90
      %p92 = scmp.eq.s32.totalorder %s26, 0
      %p93 = por %p91, %p92
      %s95 = sadd.s32 %s94, 1
      %p98 = scmp.eq.s32.totalorder %s20, 5
      %p99 = scmp.ne.s32.totalorder %s94, %s96
      %p100 = scmp.eq.s32.totalorder %s20, 0
      %p101 = por %p99, %p100
      %p102 = scmp.ne.s32.totalorder %s94, %s96
      %p103 = scmp.eq.s32.totalorder %s25, 5
      %p104 = por %p102, %p103
      %p105 = scmp.ne.s32.totalorder %s96, %s97
      %p106 = scmp.eq.s32.totalorder %s25, 0
      %p107 = por %p105, %p106
      %p108 = scmp.ne.s32.totalorder %s96, %s97
      %p109 = scmp.eq.s32.totalorder %s26, 5
      %p110 = por %p108, %p109
      %p112 = scmp.ne.s32.totalorder %s97, %s111
      %p113 = scmp.eq.s32.totalorder %s26, 0
      %p114 = por %p112, %p113
      %s116 = sadd.s32 %s115, 1
      %p119 = scmp.eq.s32.totalorder %s20, 5
      %p120 = scmp.ne.s32.totalorder %s115, %s117
      %p121 = scmp.eq.s32.totalorder %s20, 0
      %p122 = por %p120, %p121
      %p123 = scmp.ne.s32.totalorder %s115, %s117
      %p124 = scmp.eq.s32.totalorder %s25, 5
      %p125 = por %p123, %p124
      %p126 = scmp.ne.s32.totalorder %s117, %s118
      %p127 = scmp.eq.s32.totalorder %s25, 0
      %p128 = por %p126, %p127
      %p129 = scmp.ne.s32.totalorder %s117, %s118
      %p130 = scmp.eq.s32.totalorder %s26, 5
      %p131 = por %p129, %p130
      %p133 = scmp.ne.s32.totalorder %s118, %s132
      %p134 = scmp.eq.s32.totalorder %s26, 0
      %p135 = por %p133, %p134
      %s137 = sadd.s32 %s136, 1
      %p140 = scmp.eq.s32.totalorder %s20, 5
      %p141 = scmp.ne.s32.totalorder %s136, %s138
      %p142 = scmp.eq.s32.totalorder %s20, 0
      %p143 = por %p141, %p142
      %p144 = scmp.ne.s32.totalorder %s136, %s138
      %p145 = scmp.eq.s32.totalorder %s25, 5
      %p146 = por %p144, %p145
      %p147 = scmp.ne.s32.totalorder %s138, %s139
      %p148 = scmp.eq.s32.totalorder %s25, 0
      %p149 = por %p147, %p148
      %p150 = scmp.ne.s32.totalorder %s138, %s139
      %p151 = scmp.eq.s32.totalorder %s26, 5
      %p152 = por %p150, %p151
      %p154 = scmp.ne.s32.totalorder %s139, %s153
      %p155 = scmp.eq.s32.totalorder %s26, 0
      %p156 = por %p154, %p155
      %s157 = ssub.s32 %s27, %s39
      %p158 = scmp.eq.s32.totalorder %s157, 0
      %s160 = sadd.s32 %s159, 1
      %s161 = scalar_select %p158, %s159, %s160
      %p164 = pneg %p158
      %p165 = scmp.eq.s32.totalorder %s20, 5
      %p166 = por %p164, %p165
      %p167 = scmp.ne.s32.totalorder %s159, %s162
      %p168 = scmp.eq.s32.totalorder %s20, 0
      %p169 = por %p167, %p168
      %p170 = scmp.ne.s32.totalorder %s159, %s162
      %p171 = scmp.eq.s32.totalorder %s25, 5
      %p172 = por %p170, %p171
      %p173 = scmp.ne.s32.totalorder %s162, %s163
      %p174 = scmp.eq.s32.totalorder %s25, 0
      %p175 = por %p173, %p174
      %p176 = scmp.ne.s32.totalorder %s162, %s163
      %p177 = scmp.eq.s32.totalorder %s26, 5
      %p178 = por %p176, %p177
      %p180 = scmp.ne.s32.totalorder %s163, %s179
      %p181 = scmp.eq.s32.totalorder %s26, 0
      %p182 = por %p180, %p181
      %p183 = scmp.le.s32.totalorder 1, %s20
      %p184 = scmp.lt.s32.totalorder %s20, 7
      %p185 = pnand %p183, %p184
      %p186 = pneg %p185
      // Predicated region
      $region9: #{tpu_custom_call.1} parent=5 // pred_check
        _
      $region10: #{tpu_custom_call.1} parent=5 // pred_check_branch
        %188 = sbr.rel (%p185) target = $region12
      $region11: #{tpu_custom_call.1} parent=5 // pred_region
        %s189 = ssub.s32 %s20, 1
        // Predicated region
        $region13: #{tpu_custom_call.1} parent=11 // pred_check
          %p190 = pneg %p107
        $region14: #{tpu_custom_call.1} parent=11 // pred_check_branch
          %192 = sbr.rel (%p190) target = $region16
        $region15: #{tpu_custom_call.1} parent=11 // pred_region
          _
        $region16: #{tpu_custom_call.1} parent=11 // pred_fallthru
          _
        // Predicated region
        $region17: #{tpu_custom_call.1} parent=11 // pred_check
          %p193 = pneg %p128
        $region18: #{tpu_custom_call.1} parent=11 // pred_check_branch
          %195 = sbr.rel (%p193) target = $region20
        $region19: #{tpu_custom_call.1} parent=11 // pred_region
          %s197 = ssub.s32 16384, 16384
          %198 = vsyncadd [#allocation7], %s197
          %s199 = sshll.u32 [#allocation8], 4
          %s200 = int_to_ptr.vmem [resolvable:$true] %s199
          %205 = dma.hbm_to_vmem [thread:$0]  %s3, 16384, %s200, [#allocation7], 512, 512, 32
        $region20: #{tpu_custom_call.1} parent=11 // pred_fallthru
          _
        // Predicated region
        $region21: #{tpu_custom_call.1} parent=11 // pred_check
          %p206 = pneg %p149
        $region22: #{tpu_custom_call.1} parent=11 // pred_check_branch
          %208 = sbr.rel (%p206) target = $region24
        $region23: #{tpu_custom_call.1} parent=11 // pred_region
          _
        $region24: #{tpu_custom_call.1} parent=11 // pred_fallthru
          _
      $region12: #{tpu_custom_call.1} parent=5 // pred_fallthru
        _
      %p209 = scmp.lt.s32.totalorder %s20, 6
      // Predicated region
      $region25: #{tpu_custom_call.1} parent=5 // pred_check
        %p210 = pneg %p209
      $region26: #{tpu_custom_call.1} parent=5 // pred_check_branch
        %212 = sbr.rel (%p210) target = $region28
      $region27: #{tpu_custom_call.1} parent=5 // pred_region
        // Predicated region
        $region29: #{tpu_custom_call.1} parent=27 // pred_check
          %p213 = pneg %p54
        $region30: #{tpu_custom_call.1} parent=27 // pred_check_branch
          %215 = sbr.rel (%p213) target = $region32
        $region31: #{tpu_custom_call.1} parent=27 // pred_region
          %s216 = sand.u32 %s44, 1
          %s217 = scalar_lea.sflag [#allocation4], %s216
          %s218 = sand.u32 %s44, 1
          %s219 = smul.addr %s218, 8
          %s220 = scalar_lea.vmem [#allocation3], %s219
          %s221 = smul.u32 2, %s27
          %s223 = ssub.s32 128, 128
          %224 = vsyncadd %s217, %s223
          %s225 = smul.addr %s221, 2
          %s226 = sadd.s32 %s28, %s225
          %s227 = smul.addr %s226, 64
          %s228 = scalar_lea.hbm %s0, %s227
          %s229 = sshll.u32 %s220, 4
          %s230 = int_to_ptr.vmem [resolvable:$true] %s229
          %235 = dma.hbm_to_vmem [thread:$0]  %s228, 128, %s230, %s217, 128, 64, 4
        $region32: #{tpu_custom_call.1} parent=27 // pred_fallthru
          _
        // Predicated region
        $region33: #{tpu_custom_call.1} parent=27 // pred_check
          %p236 = pneg %p80
        $region34: #{tpu_custom_call.1} parent=27 // pred_check_branch
          %238 = sbr.rel (%p236) target = $region36
        $region35: #{tpu_custom_call.1} parent=27 // pred_region
          %s239 = sand.u32 %s20, 1
          %s240 = scalar_lea.sflag [#allocation7], %s239
          %s241 = sand.u32 %s70, 1
          %s242 = smul.addr %s241, 128
          %s243 = scalar_lea.vmem [#allocation6], %s242
          %s244 = smul.u32 16, %s28
          %s246 = ssub.s32 2048, 2048
          %247 = vsyncadd %s240, %s246
          %s248 = smul.addr %s244, 2
          %s249 = smul.addr %s248, 64
          %s250 = scalar_lea.hbm %s1, %s249
          %s251 = sshll.u32 %s243, 4
          %s252 = int_to_ptr.vmem [resolvable:$true] %s251
          %257 = dma.hbm_to_vmem [thread:$0]  %s250, 2048, %s252, %s240, 128, 128, 8
        $region36: #{tpu_custom_call.1} parent=27 // pred_fallthru
          _
      $region28: #{tpu_custom_call.1} parent=5 // pred_fallthru
        _
      %p258 = scmp.le.s32.totalorder 1, %s20
      %p259 = scmp.lt.s32.totalorder %s20, 7
      %p260 = pnand %p258, %p259
      %p261 = pneg %p260
      // Predicated region
      $region37: #{tpu_custom_call.1} parent=5 // pred_check
        _
      $region38: #{tpu_custom_call.1} parent=5 // pred_check_branch
        %263 = sbr.rel (%p260) target = $region40
      $region39: #{tpu_custom_call.1} parent=5 // pred_region
        %s264 = ssub.s32 %s20, 1
        %s265 = sand.u32 %s47, 1
        %s266 = scalar_lea.sflag [#allocation4], %s265
        %s267 = sand.u32 %s47, 1
        %s268 = smul.addr %s267, 8
        %s269 = scalar_lea.vmem [#allocation3], %s268
        // Predicated region
        $region41: #{tpu_custom_call.1} parent=39 // pred_check
          %p270 = pneg %p60
        $region42: #{tpu_custom_call.1} parent=39 // pred_check_branch
          %272 = sbr.rel (%p270) target = $region44
        $region43: #{tpu_custom_call.1} parent=39 // pred_region
          %273 = dma.done %s266, 128
        $region44: #{tpu_custom_call.1} parent=39 // pred_fallthru
          _
        %s274 = sand.u32 %s25, 1
        %s275 = scalar_lea.sflag [#allocation7], %s274
        %s276 = sand.u32 %s73, 1
        %s277 = smul.addr %s276, 128
        %s278 = scalar_lea.vmem [#allocation6], %s277
        // Predicated region
        $region45: #{tpu_custom_call.1} parent=39 // pred_check
          %p279 = pneg %p86
        $region46: #{tpu_custom_call.1} parent=39 // pred_check_branch
          %281 = sbr.rel (%p279) target = $region48
        $region47: #{tpu_custom_call.1} parent=39 // pred_region
          %282 = dma.done %s275, 2048
        $region48: #{tpu_custom_call.1} parent=39 // pred_fallthru
          _
        // Predicated region
        $region49: #{tpu_custom_call.1} parent=39 // pred_check
          %p283 = pneg %p128
        $region50: #{tpu_custom_call.1} parent=39 // pred_check_branch
          %285 = sbr.rel (%p283) target = $region52
        $region51: #{tpu_custom_call.1} parent=39 // pred_region
          %286 = dma.done [#allocation7], 16384
        $region52: #{tpu_custom_call.1} parent=39 // pred_fallthru
          _
        %s287 = sand.u32 %s47, 1
        %s288 = scalar_lea.sflag [#allocation4], %s287
        %s289 = sand.u32 %s47, 1
        %s290 = smul.addr %s289, 8
        %s291 = scalar_lea.vmem [#allocation3], %s290
        %p292 = pneg %p60
        %p293 = pneg %p57
        %s294 = sand.u32 %s25, 1
        %s295 = scalar_lea.sflag [#allocation7], %s294
        %s296 = sand.u32 %s73, 1
        %s297 = smul.addr %s296, 128
        %s298 = scalar_lea.vmem [#allocation6], %s297
        %p299 = pneg %p86
        %p300 = pneg %p83
        %p301 = pneg %p107
        %p302 = pneg %p104
        %p303 = pneg %p128
        %p304 = pneg %p125
        %p305 = pneg %p149
        %p306 = pneg %p146
        %p307 = pneg %p175
        %p308 = pneg %p172
        %s309 = sand.u32 %s162, 1
        %s310 = scalar_lea.sflag [#allocation5], %s309
        %s311 = sand.u32 %s162, 1
        %s312 = smul.addr %s311, 128
        %s313 = scalar_lea.vmem [#allocation9], %s312
        %s314 = smul.u32 2, %s29
        %s315 = smul.u32 16, %s30
        %s316 = smul.u32 2, %s29
        %p318 = scmp.eq.s32.totalorder %s30, 0
        // Predicated region
        $region53: #{tpu_custom_call.1} parent=39 // pred_check
          %p319 = pneg %p318
        $region54: #{tpu_custom_call.1} parent=39 // pred_check_branch
          %321 = sbr.rel (%p319) target = $region56
        $region55: #{tpu_custom_call.1} parent=39 // pred_region
          %322 = vst [vmem:[#allocation2] sm:$0xff] 0.0
          %323 = vst [vmem:[#allocation2 + $0x8] sm:$0xff] 0.0
          %324 = vst [vmem:[#allocation2 + $0x10] sm:$0xff] 0.0
          %325 = vst [vmem:[#allocation2 + $0x18] sm:$0xff] 0.0
        $region56: #{tpu_custom_call.1} parent=39 // pred_fallthru
          _
        %v326 = vld [vmem:[#allocation2] sm:$0xff]
        %v327 = vld [vmem:[#allocation2 + $0x8] sm:$0xff]
        %v328 = vld [vmem:[#allocation2 + $0x10] sm:$0xff]
        %v329 = vld [vmem:[#allocation2 + $0x18] sm:$0xff]
        %v330 = vld [vmem:[%s269] sm:$0xf]
        %v331 = vld [vmem:[%s269 + $0x4] sm:$0xf]
        %v332 = vld [vmem:[%s278] sm:$0xff]
        %v333 = vld [vmem:[%s278 + $0x8] sm:$0xff]
        %v334 = vld [vmem:[%s278 + $0x10] sm:$0xff]
        %v335 = vld [vmem:[%s278 + $0x18] sm:$0xff]
        %v336 = vld [vmem:[%s278 + $0x20] sm:$0xff]
        %v337 = vld [vmem:[%s278 + $0x28] sm:$0xff]
        %v338 = vld [vmem:[%s278 + $0x30] sm:$0xff]
        %v339 = vld [vmem:[%s278 + $0x38] sm:$0xff]
        %v340 = vld [vmem:[%s278 + $0x40] sm:$0xff]
        %v341 = vld [vmem:[%s278 + $0x48] sm:$0xff]
        %v342 = vld [vmem:[%s278 + $0x50] sm:$0xff]
        %v343 = vld [vmem:[%s278 + $0x58] sm:$0xff]
        %v344 = vld [vmem:[%s278 + $0x60] sm:$0xff]
        %v345 = vld [vmem:[%s278 + $0x68] sm:$0xff]
        %v346 = vld [vmem:[%s278 + $0x70] sm:$0xff]
        %v347 = vld [vmem:[%s278 + $0x78] sm:$0xff]
        %v350 = vunpack.c.l.b16 %v330
        %v351 = vunpack.c.l.b16 %v331
        %v352 = vpack.c.b16 %v351, %v350
        %v370 = vunpack.c.l.b16 %v332
        %v371 = vunpack.c.h.b16 %v332
        %v372 = vunpack.c.l.b16 %v333
        %v373 = vunpack.c.h.b16 %v333
        %v374 = vunpack.c.l.b16 %v334
        %v375 = vunpack.c.h.b16 %v334
        %v376 = vunpack.c.l.b16 %v335
        %v377 = vunpack.c.h.b16 %v335
        %v378 = vunpack.c.l.b16 %v336
        %v379 = vunpack.c.h.b16 %v336
        %v380 = vunpack.c.l.b16 %v337
        %v381 = vunpack.c.h.b16 %v337
        %v382 = vunpack.c.l.b16 %v338
        %v383 = vunpack.c.h.b16 %v338
        %v384 = vunpack.c.l.b16 %v339
        %v385 = vunpack.c.h.b16 %v339
        %v386 = vunpack.c.l.b16 %v340
        %v387 = vunpack.c.h.b16 %v340
        %v388 = vunpack.c.l.b16 %v341
        %v389 = vunpack.c.h.b16 %v341
        %v390 = vunpack.c.l.b16 %v342
        %v391 = vunpack.c.h.b16 %v342
        %v392 = vunpack.c.l.b16 %v343
        %v393 = vunpack.c.h.b16 %v343
        %v394 = vunpack.c.l.b16 %v344
        %v395 = vunpack.c.h.b16 %v344
        %v396 = vunpack.c.l.b16 %v345
        %v397 = vunpack.c.h.b16 %v345
        %v398 = vunpack.c.l.b16 %v346
        %v399 = vunpack.c.h.b16 %v346
        %v400 = vunpack.c.l.b16 %v347
        %v401 = vunpack.c.h.b16 %v347
        %v402 = vpack.c.b16 %v372, %v370
        %v403 = vpack.c.b16 %v373, %v371
        %v404 = vpack.c.b16 %v376, %v374
        %v405 = vpack.c.b16 %v377, %v375
        %v406 = vpack.c.b16 %v380, %v378
        %v407 = vpack.c.b16 %v381, %v379
        %v408 = vpack.c.b16 %v384, %v382
        %v409 = vpack.c.b16 %v385, %v383
        %v410 = vpack.c.b16 %v388, %v386
        %v411 = vpack.c.b16 %v389, %v387
        %v412 = vpack.c.b16 %v392, %v390
        %v413 = vpack.c.b16 %v393, %v391
        %v414 = vpack.c.b16 %v396, %v394
        %v415 = vpack.c.b16 %v397, %v395
        %v416 = vpack.c.b16 %v400, %v398
        %v417 = vpack.c.b16 %v401, %v399
        %434 = vmatprep.subr.bf16.mxu0 %v403
        %435 = vmatpush1.bf16.msra.mxu0 %v402
        %436 = vmatprep.subr.bf16.mxu0 %v405
        %437 = vmatpush1.bf16.msra.mxu0 %v404
        %438 = vmatprep.subr.bf16.mxu0 %v407
        %439 = vmatpush1.bf16.msra.mxu0 %v406
        %440 = vmatprep.subr.bf16.mxu0 %v409
        %441 = vmatpush1.bf16.msra.mxu0 %v408
        %442 = vmatprep.subr.bf16.mxu0 %v411
        %443 = vmatpush1.bf16.msra.mxu0 %v410
        %444 = vmatprep.subr.bf16.mxu0 %v413
        %445 = vmatpush1.bf16.msra.mxu0 %v412
        %446 = vmatprep.subr.bf16.mxu0 %v415
        %447 = vmatpush1.bf16.msra.mxu0 %v414
        %448 = vmatprep.subr.bf16.mxu0 %v417
        %449 = vmatpush1.bf16.msra.mxu0 %v416
        %450 = vmatprep.subr.bf16.mxu0 0
        %451 = vmatpush1.bf16.msra.mxu0 0
        %452 = vmatprep.subr.bf16.mxu0 0
        %453 = vmatpush1.bf16.msra.mxu0 0
        %454 = vmatprep.subr.bf16.mxu0 0
        %455 = vmatpush1.bf16.msra.mxu0 0
        %456 = vmatprep.subr.bf16.mxu0 0
        %457 = vmatpush1.bf16.msra.mxu0 0
        %458 = vmatprep.subr.bf16.mxu0 0
        %459 = vmatpush1.bf16.msra.mxu0 0
        %460 = vmatprep.subr.bf16.mxu0 0
        %461 = vmatpush1.bf16.msra.mxu0 0
        %462 = vmatprep.subr.bf16.mxu0 0
        %463 = vmatpush1.bf16.msra.mxu0 0
        %464 = vmatprep.subr.bf16.mxu0 0
        %465 = vmatpush1.bf16.msra.mxu0 0
        %466 = vmatprep.mubr.bf16.mxu0 0
        %467 = vmatmul.mubr.bf16.gmra.mrb[0].mxu0 %v352
        %v468 = vpop.f32.mrb[0].mxu0
        %v469 = vadd.f32 0.0, %v468
        %v470 = vpop.f32.mrb[0].mxu0
        %v471 = vadd.f32 0.0, %v470
        %v472 = vpop.f32.mrb[0].mxu0
        %v473 = vadd.f32 0.0, %v472
        %v474 = vpop.f32.mrb[0].mxu0
        %v475 = vadd.f32 0.0, %v474
        %476 = vdwg.mxu0
        %v477 = vadd.f32 %v326, %v469
        %v478 = vadd.f32 %v327, %v471
        %v479 = vadd.f32 %v328, %v473
        %v480 = vadd.f32 %v329, %v475
        %481 = vst [vmem:[#allocation2] sm:$0xff] %v477
        %482 = vst [vmem:[#allocation2 + $0x8] sm:$0xff] %v478
        %483 = vst [vmem:[#allocation2 + $0x10] sm:$0xff] %v479
        %484 = vst [vmem:[#allocation2 + $0x18] sm:$0xff] %v480
        %p485 = scmp.eq.s32.totalorder %s30, 1
        // Predicated region
        $region57: #{tpu_custom_call.1} parent=39 // pred_check
          %p486 = pneg %p485
        $region58: #{tpu_custom_call.1} parent=39 // pred_check_branch
          %488 = sbr.rel (%p486) target = $region60
        $region59: #{tpu_custom_call.1} parent=39 // pred_region
          %v489 = vld [vmem:[#allocation2] sm:$0xff]
          %v490 = vld [vmem:[#allocation2 + $0x8] sm:$0xff]
          %v491 = vld [vmem:[#allocation2 + $0x10] sm:$0xff]
          %v492 = vld [vmem:[#allocation2 + $0x18] sm:$0xff]
          %v493 = vld [vmem:[%s2] sm:$0x3]
          %v495 = vlaneseq
          %v496 = vshrl.u32 %v495, 7
          %v497 = vsub.s32 0, %v496
          %v498 = vrot.slane %v493, %v497
          %v499 = vlaneseq
          %v500 = vshrl.u32 %v499, 7
          %v501 = vsub.s32 1, %v500
          %v502 = vrot.slane %v493, %v501
          %v505 = vadd.f32 %v489, %v498
          %v506 = vadd.f32 %v490, %v502
          %v507 = vadd.f32 %v491, %v498
          %v508 = vadd.f32 %v492, %v502
          %v509 = vmax.f32 %v505, 0.0
          %v510 = vmax.f32 %v506, 0.0
          %v511 = vmax.f32 %v507, 0.0
          %v512 = vmax.f32 %v508, 0.0
          %v513 = vpack.c.bf16 %v511, %v509
          %v514 = vpack.c.bf16 %v512, %v510
          %v515 = vld [vmem:[#allocation8] sm:$0xff]
          %v516 = vld [vmem:[#allocation8 + $0x8] sm:$0xff]
          %v517 = vld [vmem:[#allocation8 + $0x10] sm:$0xff]
          %v518 = vld [vmem:[#allocation8 + $0x18] sm:$0xff]
          %v519 = vld [vmem:[#allocation8 + $0x20] sm:$0xff]
          %v520 = vld [vmem:[#allocation8 + $0x28] sm:$0xff]
          %v521 = vld [vmem:[#allocation8 + $0x30] sm:$0xff]
          %v522 = vld [vmem:[#allocation8 + $0x38] sm:$0xff]
          %v523 = vld [vmem:[#allocation8 + $0x40] sm:$0xff]
          %v524 = vld [vmem:[#allocation8 + $0x48] sm:$0xff]
          %v525 = vld [vmem:[#allocation8 + $0x50] sm:$0xff]
          %v526 = vld [vmem:[#allocation8 + $0x58] sm:$0xff]
          %v527 = vld [vmem:[#allocation8 + $0x60] sm:$0xff]
          %v528 = vld [vmem:[#allocation8 + $0x68] sm:$0xff]
          %v529 = vld [vmem:[#allocation8 + $0x70] sm:$0xff]
          %v530 = vld [vmem:[#allocation8 + $0x78] sm:$0xff]
          %v531 = vld [vmem:[#allocation8 + $0x80] sm:$0xff]
          %v532 = vld [vmem:[#allocation8 + $0x88] sm:$0xff]
          %v533 = vld [vmem:[#allocation8 + $0x90] sm:$0xff]
          %v534 = vld [vmem:[#allocation8 + $0x98] sm:$0xff]
          %v535 = vld [vmem:[#allocation8 + $0xa0] sm:$0xff]
          %v536 = vld [vmem:[#allocation8 + $0xa8] sm:$0xff]
          %v537 = vld [vmem:[#allocation8 + $0xb0] sm:$0xff]
          %v538 = vld [vmem:[#allocation8 + $0xb8] sm:$0xff]
          %v539 = vld [vmem:[#allocation8 + $0xc0] sm:$0xff]
          %v540 = vld [vmem:[#allocation8 + $0xc8] sm:$0xff]
          %v541 = vld [vmem:[#allocation8 + $0xd0] sm:$0xff]
          %v542 = vld [vmem:[#allocation8 + $0xd8] sm:$0xff]
          %v543 = vld [vmem:[#allocation8 + $0xe0] sm:$0xff]
          %v544 = vld [vmem:[#allocation8 + $0xe8] sm:$0xff]
          %v545 = vld [vmem:[#allocation8 + $0xf0] sm:$0xff]
          %v546 = vld [vmem:[#allocation8 + $0xf8] sm:$0xff]
          %v547 = vld [vmem:[#allocation8 + $0x100] sm:$0xff]
          %v548 = vld [vmem:[#allocation8 + $0x108] sm:$0xff]
          %v549 = vld [vmem:[#allocation8 + $0x110] sm:$0xff]
          %v550 = vld [vmem:[#allocation8 + $0x118] sm:$0xff]
          %v551 = vld [vmem:[#allocation8 + $0x120] sm:$0xff]
          %v552 = vld [vmem:[#allocation8 + $0x128] sm:$0xff]
          %v553 = vld [vmem:[#allocation8 + $0x130] sm:$0xff]
          %v554 = vld [vmem:[#allocation8 + $0x138] sm:$0xff]
          %v555 = vld [vmem:[#allocation8 + $0x140] sm:$0xff]
          %v556 = vld [vmem:[#allocation8 + $0x148] sm:$0xff]
          %v557 = vld [vmem:[#allocation8 + $0x150] sm:$0xff]
          %v558 = vld [vmem:[#allocation8 + $0x158] sm:$0xff]
          %v559 = vld [vmem:[#allocation8 + $0x160] sm:$0xff]
          %v560 = vld [vmem:[#allocation8 + $0x168] sm:$0xff]
          %v561 = vld [vmem:[#allocation8 + $0x170] sm:$0xff]
          %v562 = vld [vmem:[#allocation8 + $0x178] sm:$0xff]
          %v563 = vld [vmem:[#allocation8 + $0x180] sm:$0xff]
          %v564 = vld [vmem:[#allocation8 + $0x188] sm:$0xff]
          %v565 = vld [vmem:[#allocation8 + $0x190] sm:$0xff]
          %v566 = vld [vmem:[#allocation8 + $0x198] sm:$0xff]
          %v567 = vld [vmem:[#allocation8 + $0x1a0] sm:$0xff]
          %v568 = vld [vmem:[#allocation8 + $0x1a8] sm:$0xff]
          %v569 = vld [vmem:[#allocation8 + $0x1b0] sm:$0xff]
          %v570 = vld [vmem:[#allocation8 + $0x1b8] sm:$0xff]
          %v571 = vld [vmem:[#allocation8 + $0x1c0] sm:$0xff]
          %v572 = vld [vmem:[#allocation8 + $0x1c8] sm:$0xff]
          %v573 = vld [vmem:[#allocation8 + $0x1d0] sm:$0xff]
          %v574 = vld [vmem:[#allocation8 + $0x1d8] sm:$0xff]
          %v575 = vld [vmem:[#allocation8 + $0x1e0] sm:$0xff]
          %v576 = vld [vmem:[#allocation8 + $0x1e8] sm:$0xff]
          %v577 = vld [vmem:[#allocation8 + $0x1f0] sm:$0xff]
          %v578 = vld [vmem:[#allocation8 + $0x1f8] sm:$0xff]
          %v579 = vld [vmem:[#allocation8 + $0x200] sm:$0xff]
          %v580 = vld [vmem:[#allocation8 + $0x208] sm:$0xff]
          %v581 = vld [vmem:[#allocation8 + $0x210] sm:$0xff]
          %v582 = vld [vmem:[#allocation8 + $0x218] sm:$0xff]
          %v583 = vld [vmem:[#allocation8 + $0x220] sm:$0xff]
          %v584 = vld [vmem:[#allocation8 + $0x228] sm:$0xff]
          %v585 = vld [vmem:[#allocation8 + $0x230] sm:$0xff]
          %v586 = vld [vmem:[#allocation8 + $0x238] sm:$0xff]
          %v587 = vld [vmem:[#allocation8 + $0x240] sm:$0xff]
          %v588 = vld [vmem:[#allocation8 + $0x248] sm:$0xff]
          %v589 = vld [vmem:[#allocation8 + $0x250] sm:$0xff]
          %v590 = vld [vmem:[#allocation8 + $0x258] sm:$0xff]
          %v591 = vld [vmem:[#allocation8 + $0x260] sm:$0xff]
          %v592 = vld [vmem:[#allocation8 + $0x268] sm:$0xff]
          %v593 = vld [vmem:[#allocation8 + $0x270] sm:$0xff]
          %v594 = vld [vmem:[#allocation8 + $0x278] sm:$0xff]
          %v595 = vld [vmem:[#allocation8 + $0x280] sm:$0xff]
          %v596 = vld [vmem:[#allocation8 + $0x288] sm:$0xff]
          %v597 = vld [vmem:[#allocation8 + $0x290] sm:$0xff]
          %v598 = vld [vmem:[#allocation8 + $0x298] sm:$0xff]
          %v599 = vld [vmem:[#allocation8 + $0x2a0] sm:$0xff]
          %v600 = vld [vmem:[#allocation8 + $0x2a8] sm:$0xff]
          %v601 = vld [vmem:[#allocation8 + $0x2b0] sm:$0xff]
          %v602 = vld [vmem:[#allocation8 + $0x2b8] sm:$0xff]
          %v603 = vld [vmem:[#allocation8 + $0x2c0] sm:$0xff]
          %v604 = vld [vmem:[#allocation8 + $0x2c8] sm:$0xff]
          %v605 = vld [vmem:[#allocation8 + $0x2d0] sm:$0xff]
          %v606 = vld [vmem:[#allocation8 + $0x2d8] sm:$0xff]
          %v607 = vld [vmem:[#allocation8 + $0x2e0] sm:$0xff]
          %v608 = vld [vmem:[#allocation8 + $0x2e8] sm:$0xff]
          %v609 = vld [vmem:[#allocation8 + $0x2f0] sm:$0xff]
          %v610 = vld [vmem:[#allocation8 + $0x2f8] sm:$0xff]
          %v611 = vld [vmem:[#allocation8 + $0x300] sm:$0xff]
          %v612 = vld [vmem:[#allocation8 + $0x308] sm:$0xff]
          %v613 = vld [vmem:[#allocation8 + $0x310] sm:$0xff]
          %v614 = vld [vmem:[#allocation8 + $0x318] sm:$0xff]
          %v615 = vld [vmem:[#allocation8 + $0x320] sm:$0xff]
          %v616 = vld [vmem:[#allocation8 + $0x328] sm:$0xff]
          %v617 = vld [vmem:[#allocation8 + $0x330] sm:$0xff]
          %v618 = vld [vmem:[#allocation8 + $0x338] sm:$0xff]
          %v619 = vld [vmem:[#allocation8 + $0x340] sm:$0xff]
          %v620 = vld [vmem:[#allocation8 + $0x348] sm:$0xff]
          %v621 = vld [vmem:[#allocation8 + $0x350] sm:$0xff]
          %v622 = vld [vmem:[#allocation8 + $0x358] sm:$0xff]
          %v623 = vld [vmem:[#allocation8 + $0x360] sm:$0xff]
          %v624 = vld [vmem:[#allocation8 + $0x368] sm:$0xff]
          %v625 = vld [vmem:[#allocation8 + $0x370] sm:$0xff]
          %v626 = vld [vmem:[#allocation8 + $0x378] sm:$0xff]
          %v627 = vld [vmem:[#allocation8 + $0x380] sm:$0xff]
          %v628 = vld [vmem:[#allocation8 + $0x388] sm:$0xff]
          %v629 = vld [vmem:[#allocation8 + $0x390] sm:$0xff]
          %v630 = vld [vmem:[#allocation8 + $0x398] sm:$0xff]
          %v631 = vld [vmem:[#allocation8 + $0x3a0] sm:$0xff]
          %v632 = vld [vmem:[#allocation8 + $0x3a8] sm:$0xff]
          %v633 = vld [vmem:[#allocation8 + $0x3b0] sm:$0xff]
          %v634 = vld [vmem:[#allocation8 + $0x3b8] sm:$0xff]
          %v635 = vld [vmem:[#allocation8 + $0x3c0] sm:$0xff]
          %v636 = vld [vmem:[#allocation8 + $0x3c8] sm:$0xff]
          %v637 = vld [vmem:[#allocation8 + $0x3d0] sm:$0xff]
          %v638 = vld [vmem:[#allocation8 + $0x3d8] sm:$0xff]
          %v639 = vld [vmem:[#allocation8 + $0x3e0] sm:$0xff]
          %v640 = vld [vmem:[#allocation8 + $0x3e8] sm:$0xff]
          %v641 = vld [vmem:[#allocation8 + $0x3f0] sm:$0xff]
          %v642 = vld [vmem:[#allocation8 + $0x3f8] sm:$0xff]
          %v643 = vld [vmem:[%s4] sm:$0xff]
          %v645 = vlaneseq
          %v646 = vshrl.u32 %v645, 7
          %v647 = vsub.s32 0, %v646
          %v648 = vrot.slane %v643, %v647
          %v649 = vlaneseq
          %v650 = vshrl.u32 %v649, 7
          %v651 = vsub.s32 1, %v650
          %v652 = vrot.slane %v643, %v651
          %v653 = vlaneseq
          %v654 = vshrl.u32 %v653, 7
          %v655 = vsub.s32 2, %v654
          %v656 = vrot.slane %v643, %v655
          %v657 = vlaneseq
          %v658 = vshrl.u32 %v657, 7
          %v659 = vsub.s32 3, %v658
          %v660 = vrot.slane %v643, %v659
          %v661 = vlaneseq
          %v662 = vshrl.u32 %v661, 7
          %v663 = vsub.s32 4, %v662
          %v664 = vrot.slane %v643, %v663
          %v665 = vlaneseq
          %v666 = vshrl.u32 %v665, 7
          %v667 = vsub.s32 5, %v666
          %v668 = vrot.slane %v643, %v667
          %v669 = vlaneseq
          %v670 = vshrl.u32 %v669, 7
          %v671 = vsub.s32 6, %v670
          %v672 = vrot.slane %v643, %v671
          %v673 = vlaneseq
          %v674 = vshrl.u32 %v673, 7
          %v675 = vsub.s32 7, %v674
          %v676 = vrot.slane %v643, %v675
          %v813 = vunpack.c.l.b16 %v515
          %v814 = vunpack.c.h.b16 %v515
          %v815 = vunpack.c.l.b16 %v516
          %v816 = vunpack.c.h.b16 %v516
          %v817 = vunpack.c.l.b16 %v517
          %v818 = vunpack.c.h.b16 %v517
          %v819 = vunpack.c.l.b16 %v518
          %v820 = vunpack.c.h.b16 %v518
          %v821 = vunpack.c.l.b16 %v519
          %v822 = vunpack.c.h.b16 %v519
          %v823 = vunpack.c.l.b16 %v520
          %v824 = vunpack.c.h.b16 %v520
          %v825 = vunpack.c.l.b16 %v521
          %v826 = vunpack.c.h.b16 %v521
          %v827 = vunpack.c.l.b16 %v522
          %v828 = vunpack.c.h.b16 %v522
          %v829 = vunpack.c.l.b16 %v523
          %v830 = vunpack.c.h.b16 %v523
          %v831 = vunpack.c.l.b16 %v524
          %v832 = vunpack.c.h.b16 %v524
          %v833 = vunpack.c.l.b16 %v525
          %v834 = vunpack.c.h.b16 %v525
          %v835 = vunpack.c.l.b16 %v526
          %v836 = vunpack.c.h.b16 %v526
          %v837 = vunpack.c.l.b16 %v527
          %v838 = vunpack.c.h.b16 %v527
          %v839 = vunpack.c.l.b16 %v528
          %v840 = vunpack.c.h.b16 %v528
          %v841 = vunpack.c.l.b16 %v529
          %v842 = vunpack.c.h.b16 %v529
          %v843 = vunpack.c.l.b16 %v530
          %v844 = vunpack.c.h.b16 %v530
          %v845 = vunpack.c.l.b16 %v531
          %v846 = vunpack.c.h.b16 %v531
          %v847 = vunpack.c.l.b16 %v532
          %v848 = vunpack.c.h.b16 %v532
          %v849 = vunpack.c.l.b16 %v533
          %v850 = vunpack.c.h.b16 %v533
          %v851 = vunpack.c.l.b16 %v534
          %v852 = vunpack.c.h.b16 %v534
          %v853 = vunpack.c.l.b16 %v535
          %v854 = vunpack.c.h.b16 %v535
          %v855 = vunpack.c.l.b16 %v536
          %v856 = vunpack.c.h.b16 %v536
          %v857 = vunpack.c.l.b16 %v537
          %v858 = vunpack.c.h.b16 %v537
          %v859 = vunpack.c.l.b16 %v538
          %v860 = vunpack.c.h.b16 %v538
          %v861 = vunpack.c.l.b16 %v539
          %v862 = vunpack.c.h.b16 %v539
          %v863 = vunpack.c.l.b16 %v540
          %v864 = vunpack.c.h.b16 %v540
          %v865 = vunpack.c.l.b16 %v541
          %v866 = vunpack.c.h.b16 %v541
          %v867 = vunpack.c.l.b16 %v542
          %v868 = vunpack.c.h.b16 %v542
          %v869 = vunpack.c.l.b16 %v543
          %v870 = vunpack.c.h.b16 %v543
          %v871 = vunpack.c.l.b16 %v544
          %v872 = vunpack.c.h.b16 %v544
          %v873 = vunpack.c.l.b16 %v545
          %v874 = vunpack.c.h.b16 %v545
          %v875 = vunpack.c.l.b16 %v546
          %v876 = vunpack.c.h.b16 %v546
          %v877 = vunpack.c.l.b16 %v547
          %v878 = vunpack.c.h.b16 %v547
          %v879 = vunpack.c.l.b16 %v548
          %v880 = vunpack.c.h.b16 %v548
          %v881 = vunpack.c.l.b16 %v549
          %v882 = vunpack.c.h.b16 %v549
          %v883 = vunpack.c.l.b16 %v550
          %v884 = vunpack.c.h.b16 %v550
          %v885 = vunpack.c.l.b16 %v551
          %v886 = vunpack.c.h.b16 %v551
          %v887 = vunpack.c.l.b16 %v552
          %v888 = vunpack.c.h.b16 %v552
          %v889 = vunpack.c.l.b16 %v553
          %v890 = vunpack.c.h.b16 %v553
          %v891 = vunpack.c.l.b16 %v554
          %v892 = vunpack.c.h.b16 %v554
          %v893 = vunpack.c.l.b16 %v555
          %v894 = vunpack.c.h.b16 %v555
          %v895 = vunpack.c.l.b16 %v556
          %v896 = vunpack.c.h.b16 %v556
          %v897 = vunpack.c.l.b16 %v557
          %v898 = vunpack.c.h.b16 %v557
          %v899 = vunpack.c.l.b16 %v558
          %v900 = vunpack.c.h.b16 %v558
          %v901 = vunpack.c.l.b16 %v559
          %v902 = vunpack.c.h.b16 %v559
          %v903 = vunpack.c.l.b16 %v560
          %v904 = vunpack.c.h.b16 %v560
          %v905 = vunpack.c.l.b16 %v561
          %v906 = vunpack.c.h.b16 %v561
          %v907 = vunpack.c.l.b16 %v562
          %v908 = vunpack.c.h.b16 %v562
          %v909 = vunpack.c.l.b16 %v563
          %v910 = vunpack.c.h.b16 %v563
          %v911 = vunpack.c.l.b16 %v564
          %v912 = vunpack.c.h.b16 %v564
          %v913 = vunpack.c.l.b16 %v565
          %v914 = vunpack.c.h.b16 %v565
          %v915 = vunpack.c.l.b16 %v566
          %v916 = vunpack.c.h.b16 %v566
          %v917 = vunpack.c.l.b16 %v567
          %v918 = vunpack.c.h.b16 %v567
          %v919 = vunpack.c.l.b16 %v568
          %v920 = vunpack.c.h.b16 %v568
          %v921 = vunpack.c.l.b16 %v569
          %v922 = vunpack.c.h.b16 %v569
          %v923 = vunpack.c.l.b16 %v570
          %v924 = vunpack.c.h.b16 %v570
          %v925 = vunpack.c.l.b16 %v571
          %v926 = vunpack.c.h.b16 %v571
          %v927 = vunpack.c.l.b16 %v572
          %v928 = vunpack.c.h.b16 %v572
          %v929 = vunpack.c.l.b16 %v573
          %v930 = vunpack.c.h.b16 %v573
          %v931 = vunpack.c.l.b16 %v574
          %v932 = vunpack.c.h.b16 %v574
          %v933 = vunpack.c.l.b16 %v575
          %v934 = vunpack.c.h.b16 %v575
          %v935 = vunpack.c.l.b16 %v576
          %v936 = vunpack.c.h.b16 %v576
          %v937 = vunpack.c.l.b16 %v577
          %v938 = vunpack.c.h.b16 %v577
          %v939 = vunpack.c.l.b16 %v578
          %v940 = vunpack.c.h.b16 %v578
          %v941 = vunpack.c.l.b16 %v579
          %v942 = vunpack.c.h.b16 %v579
          %v943 = vunpack.c.l.b16 %v580
          %v944 = vunpack.c.h.b16 %v580
          %v945 = vunpack.c.l.b16 %v581
          %v946 = vunpack.c.h.b16 %v581
          %v947 = vunpack.c.l.b16 %v582
          %v948 = vunpack.c.h.b16 %v582
          %v949 = vunpack.c.l.b16 %v583
          %v950 = vunpack.c.h.b16 %v583
          %v951 = vunpack.c.l.b16 %v584
          %v952 = vunpack.c.h.b16 %v584
          %v953 = vunpack.c.l.b16 %v585
          %v954 = vunpack.c.h.b16 %v585
          %v955 = vunpack.c.l.b16 %v586
          %v956 = vunpack.c.h.b16 %v586
          %v957 = vunpack.c.l.b16 %v587
          %v958 = vunpack.c.h.b16 %v587
          %v959 = vunpack.c.l.b16 %v588
          %v960 = vunpack.c.h.b16 %v588
          %v961 = vunpack.c.l.b16 %v589
          %v962 = vunpack.c.h.b16 %v589
          %v963 = vunpack.c.l.b16 %v590
          %v964 = vunpack.c.h.b16 %v590
          %v965 = vunpack.c.l.b16 %v591
          %v966 = vunpack.c.h.b16 %v591
          %v967 = vunpack.c.l.b16 %v592
          %v968 = vunpack.c.h.b16 %v592
          %v969 = vunpack.c.l.b16 %v593
          %v970 = vunpack.c.h.b16 %v593
          %v971 = vunpack.c.l.b16 %v594
          %v972 = vunpack.c.h.b16 %v594
          %v973 = vunpack.c.l.b16 %v595
          %v974 = vunpack.c.h.b16 %v595
          %v975 = vunpack.c.l.b16 %v596
          %v976 = vunpack.c.h.b16 %v596
          %v977 = vunpack.c.l.b16 %v597
          %v978 = vunpack.c.h.b16 %v597
          %v979 = vunpack.c.l.b16 %v598
          %v980 = vunpack.c.h.b16 %v598
          %v981 = vunpack.c.l.b16 %v599
          %v982 = vunpack.c.h.b16 %v599
          %v983 = vunpack.c.l.b16 %v600
          %v984 = vunpack.c.h.b16 %v600
          %v985 = vunpack.c.l.b16 %v601
          %v986 = vunpack.c.h.b16 %v601
          %v987 = vunpack.c.l.b16 %v602
          %v988 = vunpack.c.h.b16 %v602
          %v989 = vunpack.c.l.b16 %v603
          %v990 = vunpack.c.h.b16 %v603
          %v991 = vunpack.c.l.b16 %v604
          %v992 = vunpack.c.h.b16 %v604
          %v993 = vunpack.c.l.b16 %v605
          %v994 = vunpack.c.h.b16 %v605
          %v995 = vunpack.c.l.b16 %v606
          %v996 = vunpack.c.h.b16 %v606
          %v997 = vunpack.c.l.b16 %v607
          %v998 = vunpack.c.h.b16 %v607
          %v999 = vunpack.c.l.b16 %v608
          %v1000 = vunpack.c.h.b16 %v608
          %v1001 = vunpack.c.l.b16 %v609
          %v1002 = vunpack.c.h.b16 %v609
          %v1003 = vunpack.c.l.b16 %v610
          %v1004 = vunpack.c.h.b16 %v610
          %v1005 = vunpack.c.l.b16 %v611
          %v1006 = vunpack.c.h.b16 %v611
          %v1007 = vunpack.c.l.b16 %v612
          %v1008 = vunpack.c.h.b16 %v612
          %v1009 = vunpack.c.l.b16 %v613
          %v1010 = vunpack.c.h.b16 %v613
          %v1011 = vunpack.c.l.b16 %v614
          %v1012 = vunpack.c.h.b16 %v614
          %v1013 = vunpack.c.l.b16 %v615
          %v1014 = vunpack.c.h.b16 %v615
          %v1015 = vunpack.c.l.b16 %v616
          %v1016 = vunpack.c.h.b16 %v616
          %v1017 = vunpack.c.l.b16 %v617
          %v1018 = vunpack.c.h.b16 %v617
          %v1019 = vunpack.c.l.b16 %v618
          %v1020 = vunpack.c.h.b16 %v618
          %v1021 = vunpack.c.l.b16 %v619
          %v1022 = vunpack.c.h.b16 %v619
          %v1023 = vunpack.c.l.b16 %v620
          %v1024 = vunpack.c.h.b16 %v620
          %v1025 = vunpack.c.l.b16 %v621
          %v1026 = vunpack.c.h.b16 %v621
          %v1027 = vunpack.c.l.b16 %v622
          %v1028 = vunpack.c.h.b16 %v622
          %v1029 = vunpack.c.l.b16 %v623
          %v1030 = vunpack.c.h.b16 %v623
          %v1031 = vunpack.c.l.b16 %v624
          %v1032 = vunpack.c.h.b16 %v624
          %v1033 = vunpack.c.l.b16 %v625
          %v1034 = vunpack.c.h.b16 %v625
          %v1035 = vunpack.c.l.b16 %v626
          %v1036 = vunpack.c.h.b16 %v626
          %v1037 = vunpack.c.l.b16 %v627
          %v1038 = vunpack.c.h.b16 %v627
          %v1039 = vunpack.c.l.b16 %v628
          %v1040 = vunpack.c.h.b16 %v628
          %v1041 = vunpack.c.l.b16 %v629
          %v1042 = vunpack.c.h.b16 %v629
          %v1043 = vunpack.c.l.b16 %v630
          %v1044 = vunpack.c.h.b16 %v630
          %v1045 = vunpack.c.l.b16 %v631
          %v1046 = vunpack.c.h.b16 %v631
          %v1047 = vunpack.c.l.b16 %v632
          %v1048 = vunpack.c.h.b16 %v632
          %v1049 = vunpack.c.l.b16 %v633
          %v1050 = vunpack.c.h.b16 %v633
          %v1051 = vunpack.c.l.b16 %v634
          %v1052 = vunpack.c.h.b16 %v634
          %v1053 = vunpack.c.l.b16 %v635
          %v1054 = vunpack.c.h.b16 %v635
          %v1055 = vunpack.c.l.b16 %v636
          %v1056 = vunpack.c.h.b16 %v636
          %v1057 = vunpack.c.l.b16 %v637
          %v1058 = vunpack.c.h.b16 %v637
          %v1059 = vunpack.c.l.b16 %v638
          %v1060 = vunpack.c.h.b16 %v638
          %v1061 = vunpack.c.l.b16 %v639
          %v1062 = vunpack.c.h.b16 %v639
          %v1063 = vunpack.c.l.b16 %v640
          %v1064 = vunpack.c.h.b16 %v640
          %v1065 = vunpack.c.l.b16 %v641
          %v1066 = vunpack.c.h.b16 %v641
          %v1067 = vunpack.c.l.b16 %v642
          %v1068 = vunpack.c.h.b16 %v642
          %v1069 = vpack.c.b16 %v821, %v813
          %v1070 = vpack.c.b16 %v822, %v814
          %v1071 = vpack.c.b16 %v823, %v815
          %v1072 = vpack.c.b16 %v824, %v816
          %v1073 = vpack.c.b16 %v825, %v817
          %v1074 = vpack.c.b16 %v826, %v818
          %v1075 = vpack.c.b16 %v827, %v819
          %v1076 = vpack.c.b16 %v828, %v820
          %v1077 = vpack.c.b16 %v837, %v829
          %v1078 = vpack.c.b16 %v838, %v830
          %v1079 = vpack.c.b16 %v839, %v831
          %v1080 = vpack.c.b16 %v840, %v832
          %v1081 = vpack.c.b16 %v841, %v833
          %v1082 = vpack.c.b16 %v842, %v834
          %v1083 = vpack.c.b16 %v843, %v835
          %v1084 = vpack.c.b16 %v844, %v836
          %v1085 = vpack.c.b16 %v853, %v845
          %v1086 = vpack.c.b16 %v854, %v846
          %v1087 = vpack.c.b16 %v855, %v847
          %v1088 = vpack.c.b16 %v856, %v848
          %v1089 = vpack.c.b16 %v857, %v849
          %v1090 = vpack.c.b16 %v858, %v850
          %v1091 = vpack.c.b16 %v859, %v851
          %v1092 = vpack.c.b16 %v860, %v852
          %v1093 = vpack.c.b16 %v869, %v861
          %v1094 = vpack.c.b16 %v870, %v862
          %v1095 = vpack.c.b16 %v871, %v863
          %v1096 = vpack.c.b16 %v872, %v864
          %v1097 = vpack.c.b16 %v873, %v865
          %v1098 = vpack.c.b16 %v874, %v866
          %v1099 = vpack.c.b16 %v875, %v867
          %v1100 = vpack.c.b16 %v876, %v868
          %v1101 = vpack.c.b16 %v885, %v877
          %v1102 = vpack.c.b16 %v886, %v878
          %v1103 = vpack.c.b16 %v887, %v879
          %v1104 = vpack.c.b16 %v888, %v880
          %v1105 = vpack.c.b16 %v889, %v881
          %v1106 = vpack.c.b16 %v890, %v882
          %v1107 = vpack.c.b16 %v891, %v883
          %v1108 = vpack.c.b16 %v892, %v884
          %v1109 = vpack.c.b16 %v901, %v893
          %v1110 = vpack.c.b16 %v902, %v894
          %v1111 = vpack.c.b16 %v903, %v895
          %v1112 = vpack.c.b16 %v904, %v896
          %v1113 = vpack.c.b16 %v905, %v897
          %v1114 = vpack.c.b16 %v906, %v898
          %v1115 = vpack.c.b16 %v907, %v899
          %v1116 = vpack.c.b16 %v908, %v900
          %v1117 = vpack.c.b16 %v917, %v909
          %v1118 = vpack.c.b16 %v918, %v910
          %v1119 = vpack.c.b16 %v919, %v911
          %v1120 = vpack.c.b16 %v920, %v912
          %v1121 = vpack.c.b16 %v921, %v913
          %v1122 = vpack.c.b16 %v922, %v914
          %v1123 = vpack.c.b16 %v923, %v915
          %v1124 = vpack.c.b16 %v924, %v916
          %v1125 = vpack.c.b16 %v933, %v925
          %v1126 = vpack.c.b16 %v934, %v926
          %v1127 = vpack.c.b16 %v935, %v927
          %v1128 = vpack.c.b16 %v936, %v928
          %v1129 = vpack.c.b16 %v937, %v929
          %v1130 = vpack.c.b16 %v938, %v930
          %v1131 = vpack.c.b16 %v939, %v931
          %v1132 = vpack.c.b16 %v940, %v932
          %v1133 = vpack.c.b16 %v949, %v941
          %v1134 = vpack.c.b16 %v950, %v942
          %v1135 = vpack.c.b16 %v951, %v943
          %v1136 = vpack.c.b16 %v952, %v944
          %v1137 = vpack.c.b16 %v953, %v945
          %v1138 = vpack.c.b16 %v954, %v946
          %v1139 = vpack.c.b16 %v955, %v947
          %v1140 = vpack.c.b16 %v956, %v948
          %v1141 = vpack.c.b16 %v965, %v957
          %v1142 = vpack.c.b16 %v966, %v958
          %v1143 = vpack.c.b16 %v967, %v959
          %v1144 = vpack.c.b16 %v968, %v960
          %v1145 = vpack.c.b16 %v969, %v961
          %v1146 = vpack.c.b16 %v970, %v962
          %v1147 = vpack.c.b16 %v971, %v963
          %v1148 = vpack.c.b16 %v972, %v964
          %v1149 = vpack.c.b16 %v981, %v973
          %v1150 = vpack.c.b16 %v982, %v974
          %v1151 = vpack.c.b16 %v983, %v975
          %v1152 = vpack.c.b16 %v984, %v976
          %v1153 = vpack.c.b16 %v985, %v977
          %v1154 = vpack.c.b16 %v986, %v978
          %v1155 = vpack.c.b16 %v987, %v979
          %v1156 = vpack.c.b16 %v988, %v980
          %v1157 = vpack.c.b16 %v997, %v989
          %v1158 = vpack.c.b16 %v998, %v990
          %v1159 = vpack.c.b16 %v999, %v991
          %v1160 = vpack.c.b16 %v1000, %v992
          %v1161 = vpack.c.b16 %v1001, %v993
          %v1162 = vpack.c.b16 %v1002, %v994
          %v1163 = vpack.c.b16 %v1003, %v995
          %v1164 = vpack.c.b16 %v1004, %v996
          %v1165 = vpack.c.b16 %v1013, %v1005
          %v1166 = vpack.c.b16 %v1014, %v1006
          %v1167 = vpack.c.b16 %v1015, %v1007
          %v1168 = vpack.c.b16 %v1016, %v1008
          %v1169 = vpack.c.b16 %v1017, %v1009
          %v1170 = vpack.c.b16 %v1018, %v1010
          %v1171 = vpack.c.b16 %v1019, %v1011
          %v1172 = vpack.c.b16 %v1020, %v1012
          %v1173 = vpack.c.b16 %v1029, %v1021
          %v1174 = vpack.c.b16 %v1030, %v1022
          %v1175 = vpack.c.b16 %v1031, %v1023
          %v1176 = vpack.c.b16 %v1032, %v1024
          %v1177 = vpack.c.b16 %v1033, %v1025
          %v1178 = vpack.c.b16 %v1034, %v1026
          %v1179 = vpack.c.b16 %v1035, %v1027
          %v1180 = vpack.c.b16 %v1036, %v1028
          %v1181 = vpack.c.b16 %v1045, %v1037
          %v1182 = vpack.c.b16 %v1046, %v1038
          %v1183 = vpack.c.b16 %v1047, %v1039
          %v1184 = vpack.c.b16 %v1048, %v1040
          %v1185 = vpack.c.b16 %v1049, %v1041
          %v1186 = vpack.c.b16 %v1050, %v1042
          %v1187 = vpack.c.b16 %v1051, %v1043
          %v1188 = vpack.c.b16 %v1052, %v1044
          %v1189 = vpack.c.b16 %v1061, %v1053
          %v1190 = vpack.c.b16 %v1062, %v1054
          %v1191 = vpack.c.b16 %v1063, %v1055
          %v1192 = vpack.c.b16 %v1064, %v1056
          %v1193 = vpack.c.b16 %v1065, %v1057
          %v1194 = vpack.c.b16 %v1066, %v1058
          %v1195 = vpack.c.b16 %v1067, %v1059
          %v1196 = vpack.c.b16 %v1068, %v1060
          %1325 = vmatprep.subr.bf16.mxu0 %v1070
          %1326 = vmatpush1.bf16.msra.mxu0 %v1069
          %1327 = vmatprep.subr.bf16.mxu0 %v1078
          %1328 = vmatpush1.bf16.msra.mxu0 %v1077
          %1329 = vmatprep.subr.bf16.mxu0 %v1086
          %1330 = vmatpush1.bf16.msra.mxu0 %v1085
          %1331 = vmatprep.subr.bf16.mxu0 %v1094
          %1332 = vmatpush1.bf16.msra.mxu0 %v1093
          %1333 = vmatprep.subr.bf16.mxu0 %v1102
          %1334 = vmatpush1.bf16.msra.mxu0 %v1101
          %1335 = vmatprep.subr.bf16.mxu0 %v1110
          %1336 = vmatpush1.bf16.msra.mxu0 %v1109
          %1337 = vmatprep.subr.bf16.mxu0 %v1118
          %1338 = vmatpush1.bf16.msra.mxu0 %v1117
          %1339 = vmatprep.subr.bf16.mxu0 %v1126
          %1340 = vmatpush1.bf16.msra.mxu0 %v1125
          %1341 = vmatprep.subr.bf16.mxu0 %v1134
          %1342 = vmatpush1.bf16.msra.mxu0 %v1133
          %1343 = vmatprep.subr.bf16.mxu0 %v1142
          %1344 = vmatpush1.bf16.msra.mxu0 %v1141
          %1345 = vmatprep.subr.bf16.mxu0 %v1150
          %1346 = vmatpush1.bf16.msra.mxu0 %v1149
          %1347 = vmatprep.subr.bf16.mxu0 %v1158
          %1348 = vmatpush1.bf16.msra.mxu0 %v1157
          %1349 = vmatprep.subr.bf16.mxu0 %v1166
          %1350 = vmatpush1.bf16.msra.mxu0 %v1165
          %1351 = vmatprep.subr.bf16.mxu0 %v1174
          %1352 = vmatpush1.bf16.msra.mxu0 %v1173
          %1353 = vmatprep.subr.bf16.mxu0 %v1182
          %1354 = vmatpush1.bf16.msra.mxu0 %v1181
          %1355 = vmatprep.subr.bf16.mxu0 %v1190
          %1356 = vmatpush1.bf16.msra.mxu0 %v1189
          %1357 = vmatprep.mubr.bf16.mxu0 %v514
          %1358 = vmatmul.mubr.bf16.gmra.mrb[0].mxu0 %v513
          %v1359 = vpop.f32.mrb[0].mxu0
          %v1360 = vadd.f32 %v648, %v1359
          %v1361 = vpop.f32.mrb[0].mxu0
          %v1362 = vadd.f32 %v652, %v1361
          %v1363 = vpop.f32.mrb[0].mxu0
          %v1364 = vadd.f32 %v648, %v1363
          %v1365 = vpop.f32.mrb[0].mxu0
          %v1366 = vadd.f32 %v652, %v1365
          %1367 = vdwg.mxu0
          %1368 = vmatprep.subr.bf16.mxu0 %v1072
          %1369 = vmatpush1.bf16.msra.mxu0 %v1071
          %1370 = vmatprep.subr.bf16.mxu0 %v1080
          %1371 = vmatpush1.bf16.msra.mxu0 %v1079
          %1372 = vmatprep.subr.bf16.mxu0 %v1088
          %1373 = vmatpush1.bf16.msra.mxu0 %v1087
          %1374 = vmatprep.subr.bf16.mxu0 %v1096
          %1375 = vmatpush1.bf16.msra.mxu0 %v1095
          %1376 = vmatprep.subr.bf16.mxu0 %v1104
          %1377 = vmatpush1.bf16.msra.mxu0 %v1103
          %1378 = vmatprep.subr.bf16.mxu0 %v1112
          %1379 = vmatpush1.bf16.msra.mxu0 %v1111
          %1380 = vmatprep.subr.bf16.mxu0 %v1120
          %1381 = vmatpush1.bf16.msra.mxu0 %v1119
          %1382 = vmatprep.subr.bf16.mxu0 %v1128
          %1383 = vmatpush1.bf16.msra.mxu0 %v1127
          %1384 = vmatprep.subr.bf16.mxu0 %v1136
          %1385 = vmatpush1.bf16.msra.mxu0 %v1135
          %1386 = vmatprep.subr.bf16.mxu0 %v1144
          %1387 = vmatpush1.bf16.msra.mxu0 %v1143
          %1388 = vmatprep.subr.bf16.mxu0 %v1152
          %1389 = vmatpush1.bf16.msra.mxu0 %v1151
          %1390 = vmatprep.subr.bf16.mxu0 %v1160
          %1391 = vmatpush1.bf16.msra.mxu0 %v1159
          %1392 = vmatprep.subr.bf16.mxu0 %v1168
          %1393 = vmatpush1.bf16.msra.mxu0 %v1167
          %1394 = vmatprep.subr.bf16.mxu0 %v1176
          %1395 = vmatpush1.bf16.msra.mxu0 %v1175
          %1396 = vmatprep.subr.bf16.mxu0 %v1184
          %1397 = vmatpush1.bf16.msra.mxu0 %v1183
          %1398 = vmatprep.subr.bf16.mxu0 %v1192
          %1399 = vmatpush1.bf16.msra.mxu0 %v1191
          %1400 = vmatprep.mubr.bf16.mxu0 %v514
          %1401 = vmatmul.mubr.bf16.gmra.mrb[0].mxu0 %v513
          %v1402 = vpop.f32.mrb[0].mxu0
          %v1403 = vadd.f32 %v656, %v1402
          %v1404 = vpop.f32.mrb[0].mxu0
          %v1405 = vadd.f32 %v660, %v1404
          %v1406 = vpop.f32.mrb[0].mxu0
          %v1407 = vadd.f32 %v656, %v1406
          %v1408 = vpop.f32.mrb[0].mxu0
          %v1409 = vadd.f32 %v660, %v1408
          %1410 = vdwg.mxu0
          %1411 = vmatprep.subr.bf16.mxu0 %v1074
          %1412 = vmatpush1.bf16.msra.mxu0 %v1073
          %1413 = vmatprep.subr.bf16.mxu0 %v1082
          %1414 = vmatpush1.bf16.msra.mxu0 %v1081
          %1415 = vmatprep.subr.bf16.mxu0 %v1090
          %1416 = vmatpush1.bf16.msra.mxu0 %v1089
          %1417 = vmatprep.subr.bf16.mxu0 %v1098
          %1418 = vmatpush1.bf16.msra.mxu0 %v1097
          %1419 = vmatprep.subr.bf16.mxu0 %v1106
          %1420 = vmatpush1.bf16.msra.mxu0 %v1105
          %1421 = vmatprep.subr.bf16.mxu0 %v1114
          %1422 = vmatpush1.bf16.msra.mxu0 %v1113
          %1423 = vmatprep.subr.bf16.mxu0 %v1122
          %1424 = vmatpush1.bf16.msra.mxu0 %v1121
          %1425 = vmatprep.subr.bf16.mxu0 %v1130
          %1426 = vmatpush1.bf16.msra.mxu0 %v1129
          %1427 = vmatprep.subr.bf16.mxu0 %v1138
          %1428 = vmatpush1.bf16.msra.mxu0 %v1137
          %1429 = vmatprep.subr.bf16.mxu0 %v1146
          %1430 = vmatpush1.bf16.msra.mxu0 %v1145
          %1431 = vmatprep.subr.bf16.mxu0 %v1154
          %1432 = vmatpush1.bf16.msra.mxu0 %v1153
          %1433 = vmatprep.subr.bf16.mxu0 %v1162
          %1434 = vmatpush1.bf16.msra.mxu0 %v1161
          %1435 = vmatprep.subr.bf16.mxu0 %v1170
          %1436 = vmatpush1.bf16.msra.mxu0 %v1169
          %1437 = vmatprep.subr.bf16.mxu0 %v1178
          %1438 = vmatpush1.bf16.msra.mxu0 %v1177
          %1439 = vmatprep.subr.bf16.mxu0 %v1186
          %1440 = vmatpush1.bf16.msra.mxu0 %v1185
          %1441 = vmatprep.subr.bf16.mxu0 %v1194
          %1442 = vmatpush1.bf16.msra.mxu0 %v1193
          %1443 = vmatprep.mubr.bf16.mxu0 %v514
          %1444 = vmatmul.mubr.bf16.gmra.mrb[0].mxu0 %v513
          %v1445 = vpop.f32.mrb[0].mxu0
          %v1446 = vadd.f32 %v664, %v1445
          %v1447 = vpop.f32.mrb[0].mxu0
          %v1448 = vadd.f32 %v668, %v1447
          %v1449 = vpop.f32.mrb[0].mxu0
          %v1450 = vadd.f32 %v664, %v1449
          %v1451 = vpop.f32.mrb[0].mxu0
          %v1452 = vadd.f32 %v668, %v1451
          %1453 = vdwg.mxu0
          %1454 = vmatprep.subr.bf16.mxu0 %v1076
          %1455 = vmatpush1.bf16.msra.mxu0 %v1075
          %1456 = vmatprep.subr.bf16.mxu0 %v1084
          %1457 = vmatpush1.bf16.msra.mxu0 %v1083
          %1458 = vmatprep.subr.bf16.mxu0 %v1092
          %1459 = vmatpush1.bf16.msra.mxu0 %v1091
          %1460 = vmatprep.subr.bf16.mxu0 %v1100
          %1461 = vmatpush1.bf16.msra.mxu0 %v1099
          %1462 = vmatprep.subr.bf16.mxu0 %v1108
          %1463 = vmatpush1.bf16.msra.mxu0 %v1107
          %1464 = vmatprep.subr.bf16.mxu0 %v1116
          %1465 = vmatpush1.bf16.msra.mxu0 %v1115
          %1466 = vmatprep.subr.bf16.mxu0 %v1124
          %1467 = vmatpush1.bf16.msra.mxu0 %v1123
          %1468 = vmatprep.subr.bf16.mxu0 %v1132
          %1469 = vmatpush1.bf16.msra.mxu0 %v1131
          %1470 = vmatprep.subr.bf16.mxu0 %v1140
          %1471 = vmatpush1.bf16.msra.mxu0 %v1139
          %1472 = vmatprep.subr.bf16.mxu0 %v1148
          %1473 = vmatpush1.bf16.msra.mxu0 %v1147
          %1474 = vmatprep.subr.bf16.mxu0 %v1156
          %1475 = vmatpush1.bf16.msra.mxu0 %v1155
          %1476 = vmatprep.subr.bf16.mxu0 %v1164
          %1477 = vmatpush1.bf16.msra.mxu0 %v1163
          %1478 = vmatprep.subr.bf16.mxu0 %v1172
          %1479 = vmatpush1.bf16.msra.mxu0 %v1171
          %1480 = vmatprep.subr.bf16.mxu0 %v1180
          %1481 = vmatpush1.bf16.msra.mxu0 %v1179
          %1482 = vmatprep.subr.bf16.mxu0 %v1188
          %1483 = vmatpush1.bf16.msra.mxu0 %v1187
          %1484 = vmatprep.subr.bf16.mxu0 %v1196
          %1485 = vmatpush1.bf16.msra.mxu0 %v1195
          %1486 = vmatprep.mubr.bf16.mxu0 %v514
          %1487 = vmatmul.mubr.bf16.gmra.mrb[0].mxu0 %v513
          %v1488 = vpop.f32.mrb[0].mxu0
          %v1489 = vadd.f32 %v672, %v1488
          %v1490 = vpop.f32.mrb[0].mxu0
          %v1491 = vadd.f32 %v676, %v1490
          %v1492 = vpop.f32.mrb[0].mxu0
          %v1493 = vadd.f32 %v672, %v1492
          %v1494 = vpop.f32.mrb[0].mxu0
          %v1495 = vadd.f32 %v676, %v1494
          %1496 = vdwg.mxu0
          %1497 = vst [vmem:[%s313] sm:$0xff] %v1360
          %1498 = vst [vmem:[%s313 + $0x8] sm:$0xff] %v1362
          %1499 = vst [vmem:[%s313 + $0x10] sm:$0xff] %v1403
          %1500 = vst [vmem:[%s313 + $0x18] sm:$0xff] %v1405
          %1501 = vst [vmem:[%s313 + $0x20] sm:$0xff] %v1446
          %1502 = vst [vmem:[%s313 + $0x28] sm:$0xff] %v1448
          %1503 = vst [vmem:[%s313 + $0x30] sm:$0xff] %v1489
          %1504 = vst [vmem:[%s313 + $0x38] sm:$0xff] %v1491
          %1505 = vst [vmem:[%s313 + $0x40] sm:$0xff] %v1364
          %1506 = vst [vmem:[%s313 + $0x48] sm:$0xff] %v1366
          %1507 = vst [vmem:[%s313 + $0x50] sm:$0xff] %v1407
          %1508 = vst [vmem:[%s313 + $0x58] sm:$0xff] %v1409
          %1509 = vst [vmem:[%s313 + $0x60] sm:$0xff] %v1450
          %1510 = vst [vmem:[%s313 + $0x68] sm:$0xff] %v1452
          %1511 = vst [vmem:[%s313 + $0x70] sm:$0xff] %v1493
          %1512 = vst [vmem:[%s313 + $0x78] sm:$0xff] %v1495
        $region60: #{tpu_custom_call.1} parent=39 // pred_fallthru
          _
        %s1513 = sand.u32 %s162, 1
        %s1514 = scalar_lea.sflag [#allocation5], %s1513
        %s1515 = sand.u32 %s162, 1
        %s1516 = smul.addr %s1515, 128
        %s1517 = scalar_lea.vmem [#allocation9], %s1516
        // Predicated region
        $region61: #{tpu_custom_call.1} parent=39 // pred_check
          %p1518 = pneg %p172
        $region62: #{tpu_custom_call.1} parent=39 // pred_check_branch
          %1520 = sbr.rel (%p1518) target = $region64
        $region63: #{tpu_custom_call.1} parent=39 // pred_region
          %s1521 = smul.u32 2, %s29
          %s1523 = ssub.s32 2048, 2048
          %1524 = vsyncadd %s1514, %s1523
          %s1525 = smul.addr %s1521, 8
          %s1526 = smul.addr %s1525, 128
          %s1527 = scalar_lea.hbm %s5, %s1526
          %s1528 = sshll.u32 %s1517, 4
          %s1529 = int_to_ptr.vmem [resolvable:$true] %s1528
          %1534 = dma.vmem_to_hbm [thread:$0]  %s1529, 2048, %s1527, %s1514, 1024, 1024, 64
        $region64: #{tpu_custom_call.1} parent=39 // pred_fallthru
          _
      $region40: #{tpu_custom_call.1} parent=5 // pred_fallthru
        _
      %p1535 = scmp.le.s32.totalorder 2, %s20
      // Predicated region
      $region65: #{tpu_custom_call.1} parent=5 // pred_check
        %p1536 = pneg %p1535
      $region66: #{tpu_custom_call.1} parent=5 // pred_check_branch
        %1538 = sbr.rel (%p1536) target = $region68
      $region67: #{tpu_custom_call.1} parent=5 // pred_region
        %s1539 = ssub.s32 %s20, 2
        // Predicated region
        $region69: #{tpu_custom_call.1} parent=67 // pred_check
          %p1540 = pneg %p178
        $region70: #{tpu_custom_call.1} parent=67 // pred_check_branch
          %1542 = sbr.rel (%p1540) target = $region72
        $region71: #{tpu_custom_call.1} parent=67 // pred_region
          %s1543 = sand.u32 %s163, 1
          %s1544 = scalar_lea.sflag [#allocation5], %s1543
          %s1545 = sand.u32 %s163, 1
          %s1546 = smul.addr %s1545, 128
          %s1547 = scalar_lea.vmem [#allocation9], %s1546
          %1548 = dma.done %s1544, 2048
        $region72: #{tpu_custom_call.1} parent=67 // pred_fallthru
          _
      $region68: #{tpu_custom_call.1} parent=5 // pred_fallthru
        _
    $region6: #{tpu_custom_call.1} parent=1 // loop_footer
      %s24 = sadd.s32 1, %s20
    $region7: #{tpu_custom_call.1} parent=1 // loop_footer_branch
      %19 = sbr.rel target = $region3
    $region8: #{tpu_custom_call.1} parent=1 // loop_exit
      _
    %1549 = vsyncpa [#allocation4], 1
    %s1550 = scalar_lea.sflag [#allocation4], 1
    %1551 = vsyncpa %s1550, 1
    %1552 = vsyncpa [#allocation7], 1
    %s1553 = scalar_lea.sflag [#allocation7], 1
    %1554 = vsyncpa %s1553, 1
    %1555 = vsyncpa [#allocation5], 1
    %s1556 = scalar_lea.sflag [#allocation5], 1
    %1557 = vsyncpa %s1556, 1

</llo_original>
